<compile_context>
chip_gen: v7x
topology: tpu7x:2x2x1
jax: 0.10.0
libtpu: 0.0.40
codegen_flags: <defaults>
</compile_context>

<pallas_src>
import functools

import jax
import jax.numpy as jnp
from jax import lax
from jax.experimental import pallas as pl
from jax.experimental.pallas import tpu as pltpu


# Contract the lane (last) axis of both operands: x[tm,D] @ W[th,D]^T, a
# native MXU pattern (no per-step XLU transpose of the weight tile).
_DN_RHS_T = (((1,), (1,)), ((), ()))


def _swiglu_partial(x_ref, w1_ref, w3_ref, w2_ref):
    """Down-projected SwiGLU contribution of one hidden slice, f32."""
    x = x_ref[...]
    h1 = lax.dot_general(x, w1_ref[...], _DN_RHS_T,
                         preferred_element_type=jnp.float32)
    h3 = lax.dot_general(x, w3_ref[...], _DN_RHS_T,
                         preferred_element_type=jnp.float32)
    g = (h1 * jax.nn.sigmoid(h1)) * h3          # silu(gate) * up, f32
    # g is downcast to the operand dtype before the down projection
    # (deliberate, standard practice); accumulation stays f32.
    return lax.dot_general(g.astype(x.dtype), w2_ref[...], _DN_RHS_T,
                           preferred_element_type=jnp.float32)


def _ffn_kernel_single(x_ref, w1_ref, w3_ref, w2_ref, o_ref):
    """Whole hidden dim in one step: no accumulator scratch, no pl.when."""
    o_ref[...] = _swiglu_partial(x_ref, w1_ref, w3_ref, w2_ref).astype(o_ref.dtype)


def _ffn_kernel_acc(x_ref, w1_ref, w3_ref, w2_ref, o_ref, acc_ref):
    """H-tiled reduction (grid axis 1, >= 2 steps) with an f32 accumulator."""
    h_idx = pl.program_id(1)
    last = pl.num_programs(1) - 1
    part = _swiglu_partial(x_ref, w1_ref, w3_ref, w2_ref)

    @pl.when(h_idx == 0)
    def _():
        acc_ref[...] = part               # no separate zero-fill pass

    @pl.when((h_idx > 0) & (h_idx < last))
    def _():
        acc_ref[...] += part

    @pl.when(h_idx == last)               # last >= 1 in this kernel
    def _():
        # Fused finalize: avoid += followed by a re-read of acc.
        o_ref[...] = (acc_ref[...] + part).astype(o_ref.dtype)


def _round_down(x: int, m: int) -> int:
    return max(m, (x // m) * m)


def _pick_hidden_tile(H: int, th: int) -> int:
    """Largest multiple of 128 <= th that divides H (else H itself)."""
    if H % 128 != 0:
        # TODO(synk): hidden dims that are not multiples of 128 fall back to a
        # single full-H weight tile; very large such H could exceed the v7x
        # VMEM budget (the fit loop below can then only shrink tm).
        return H
    th = _round_down(min(th, H), 128)
    while H % th != 0:
        th -= 128
    return th


def _tpu_generation() -> str:
    try:
        kind = jax.devices()[0].device_kind.lower()
    except Exception:
        return "unknown"
    for tag in ("v7", "v6", "v5"):
        if tag in kind:
            return tag
    return "unknown"


def _vmem_capacity_bytes() -> int:
    try:
        return int(pltpu.get_tpu_info().vmem_capacity_bytes)
    except Exception:
        return 64 << 20        # conservative: v7x per-TensorCore VMEM


def _block_spec(shape, index_map, buffers=None):
    """BlockSpec with optional explicit buffer count (graceful fallback)."""
    if buffers is None:
        return pl.BlockSpec(shape, index_map)
    try:
        return pl.BlockSpec(shape, index_map, pipeline_mode=pl.Buffered(buffers))
    except (TypeError, AttributeError):
        return pl.BlockSpec(shape, index_map)


@functools.partial(jax.jit, static_argnames=("tm", "th", "compute_dtype"))
def feed_forward(x, w1, w2, w3, *, tm=None, th=None, compute_dtype=None):
    """x: [B, S, D]; w1, w3: [H, D]; w2: [D, H]  (PyTorch nn.Linear layout)."""
    if compute_dtype is not None:
        x = x.astype(compute_dtype)
        w1 = w1.astype(compute_dtype)
        w2 = w2.astype(compute_dtype)
        w3 = w3.astype(compute_dtype)

    B, S, D = x.shape
    H = w1.shape[0]
    M = B * S
    el = jnp.dtype(x.dtype).itemsize

    x2d = x.reshape(M, D)
    pad = (-M) % 8                       # sublane granule only, never up to tm
    if pad:
        x2d = jnp.pad(x2d, ((0, pad), (0, 0)))
    Mp = x2d.shape[0]

    # ---- generation-aware tile selection (roofline knee) -------------------
    gen = _tpu_generation()
    if tm is None:
        tm = {"v6": 1024, "v7": 512, "v5": 512}.get(gen, 512)
    if th is None:
        th = 512

    th_eff = _pick_hidden_tile(H, th)
    tm_eff = _round_down(min(tm, Mp), 8)

    # v7x megacore: ensure >= 2 token tiles when there is enough work so the
    # "parallel" axis can be split across both TensorCores.
    if gen == "v7" and Mp >= 512 and pl.cdiv(Mp, tm_eff) == 1:
        tm_eff = ((Mp // 2 + 7) // 8) * 8

    # ---- VMEM fit: shrink th (weight buffers) first, then tm ---------------
    def vmem_need(tm_, th_):
        multi = (H // th_) > 1
        n = (2 if multi else 4) * tm_ * D * el        # x + out buffers
        n += (2 if multi else 1) * 3 * th_ * D * el   # w1/w3/w2 buffers
        if multi:
            n += tm_ * D * 4                          # f32 accumulator
        return n + (2 << 20)                          # compiler slack

    budget = int(0.9 * _vmem_capacity_bytes())
    while vmem_need(tm_eff, th_eff) > budget and th_eff > 128 and H % 128 == 0:
        th_eff = _pick_hidden_tile(H, th_eff - 128)
    while vmem_need(tm_eff, th_eff) > budget and tm_eff > 64:
        tm_eff = _round_down(tm_eff // 2, 8)

    grid_h = H // th_eff
    n_token_tiles = pl.cdiv(Mp, tm_eff)
    vmem_limit = int(min(max(vmem_need(tm_eff, th_eff), 32 << 20), budget))

    cost = pl.CostEstimate(
        flops=6 * Mp * D * H,
        transcendentals=Mp * H,
        # Weights are re-streamed once per token tile.
        bytes_accessed=(2 * Mp * D + n_token_tiles * 3 * D * H) * el,
    )

    if grid_h == 1:
        # Single reduction step: no accumulator scratch / init / finalize.
        grid = (n_token_tiles,)
        in_specs = [
            _block_spec((tm_eff, D), lambda i: (i, 0)),            # x (pipelined)
            _block_spec((H, D), lambda i: (0, 0), buffers=1),      # w1 (resident)
            _block_spec((H, D), lambda i: (0, 0), buffers=1),      # w3 (resident)
            _block_spec((D, H), lambda i: (0, 0), buffers=1),      # w2 (resident)
        ]
        out_specs = _block_spec((tm_eff, D), lambda i: (i, 0))
        scratch_shapes = []
        kernel = _ffn_kernel_single
        dims = ("parallel",)
    else:
        grid = (n_token_tiles, grid_h)
        in_specs = [
            # x / out change once per grid_h steps -> single-buffer them,
            # spend the VMEM on larger tm/th instead.
            _block_spec((tm_eff, D), lambda i, h: (i, 0), buffers=1),   # x
            _block_spec((th_eff, D), lambda i, h: (h, 0)),              # w1 slice
            _block_spec((th_eff, D), lambda i, h: (h, 0)),              # w3 slice
            _block_spec((D, th_eff), lambda i, h: (0, h)),              # w2 slice
        ]
        out_specs = _block_spec((tm_eff, D), lambda i, h: (i, 0), buffers=1)
        scratch_shapes = [pltpu.VMEM((tm_eff, D), jnp.float32)]
        kernel = _ffn_kernel_acc
        dims = ("parallel", "arbitrary")

    out = pl.pallas_call(
        kernel,
        out_shape=jax.ShapeDtypeStruct((Mp, D), x.dtype),
        grid_spec=pltpu.PrefetchScalarGridSpec(
            num_scalar_prefetch=0,
            grid=grid,
            in_specs=in_specs,
            out_specs=out_specs,
            scratch_shapes=scratch_shapes,
        ),
        compiler_params=pltpu.CompilerParams(
            dimension_semantics=dims,
            vmem_limit_bytes=vmem_limit,
        ),
        cost_estimate=cost,
    )(x2d, w1, w3, w2)

    return out[:M].reshape(B, S, D)


def _reference(x, w1, w2, w3):
    xw1 = jnp.einsum("bsd,hd->bsh", x, w1)
    xv = jnp.einsum("bsd,hd->bsh", x, w3)
    sxw1 = xw1 * jax.nn.sigmoid(xw1)
    return jnp.einsum("bsh,dh->bsd", sxw1 * xv, w2)


if __name__ == "__main__":
    # ModelArgs defaults: dim=128, hidden_dim=256; small batch/seq.
    B, S, D, Hd = 2, 8, 128, 256

    key = jax.random.PRNGKey(0)
    kx, k1, k2, k3 = jax.random.split(key, 4)

    x = jax.random.normal(kx, (B, S, D), dtype=jnp.float32)
    # nn.Linear(in, out) weight shape is (out, in); deterministic init.
    scale1 = 1.0 / (D ** 0.5)
    scale2 = 1.0 / (Hd ** 0.5)
    w1 = jax.random.uniform(k1, (Hd, D), jnp.float32, -scale1, scale1)
    w2 = jax.random.uniform(k2, (D, Hd), jnp.float32, -scale2, scale2)
    w3 = jax.random.uniform(k3, (Hd, D), jnp.float32, -scale1, scale1)

    ref = _reference(x, w1, w2, w3)

    # Default (single hidden step at these toy dims -> no-accumulator kernel).
    out = jax.block_until_ready(feed_forward(x, w1, w2, w3))
    assert out.shape == (B, S, D)
    assert jnp.allclose(out, ref, atol=1e-4, rtol=1e-4), "mismatch (default)"

    # Force the H-tiled reduction path (2 hidden steps) to exercise the
    # accumulator init / accumulate / fused-finalize logic.
    out2 = jax.block_until_ready(feed_forward(x, w1, w2, w3, tm=128, th=128))
    assert jnp.allclose(out2, ref, atol=1e-4, rtol=1e-4), "mismatch (H-tiled)"

    # bf16 operands (fast MXU path on v6e/v7x), f32 accumulation inside.
    out_bf16 = jax.block_until_ready(
        feed_forward(x, w1, w2, w3, compute_dtype=jnp.bfloat16))
    assert jnp.allclose(out_bf16.astype(jnp.float32), ref,
                        atol=1e-1, rtol=1e-1), "mismatch (bf16)"

    print("KERNEL_OK")
</pallas_src>

<mosaic_0001>
module attributes {stable_mosaic.version = 11 : i64} {
  func.func @_ffn_kernel_single(%arg0: i32, %arg1: memref<16x128xf32, #tpu.memory_space<vmem>>, %arg2: memref<256x128xf32, #tpu.memory_space<vmem>>, %arg3: memref<256x128xf32, #tpu.memory_space<vmem>>, %arg4: memref<128x256xf32, #tpu.memory_space<vmem>>, %arg5: memref<16x128xf32, #tpu.memory_space<vmem>>) attributes {dimension_semantics = [#tpu.dimension_semantics<parallel>], iteration_bounds = array<i64: 1>, scalar_prefetch = 0 : i64, scratch_operands = 0 : i64, tpu.core_type = #tpu.core_type<tc>, window_params = [{transform_indices = @transform_0, window_bounds = array<i64: 16, 128>}, {pipeline_mode = #tpu.pipeline_mode<synchronous>, transform_indices = @transform_1, window_bounds = array<i64: 256, 128>}, {pipeline_mode = #tpu.pipeline_mode<synchronous>, transform_indices = @transform_2, window_bounds = array<i64: 256, 128>}, {pipeline_mode = #tpu.pipeline_mode<synchronous>, transform_indices = @transform_3, window_bounds = array<i64: 128, 256>}, {transform_indices = @transform_4, window_bounds = array<i64: 16, 128>}]} {
    %c0 = arith.constant 0 : index
    %c0_0 = arith.constant 0 : index
    %0 = vector.load %arg1[%c0, %c0_0] : memref<16x128xf32, #tpu.memory_space<vmem>>, vector<16x128xf32>
    %c0_1 = arith.constant 0 : index
    %c0_2 = arith.constant 0 : index
    %1 = vector.load %arg2[%c0_1, %c0_2] : memref<256x128xf32, #tpu.memory_space<vmem>>, vector<256x128xf32>
    %cst = arith.constant dense<0.000000e+00> : vector<16x256xf32>
    %2 = tpu.matmul %0, %1, %cst {dimension_numbers = #tpu.dot_dimension_numbers<[1], [1], [0], [0], [0, 0, 1, 0], [], []>} : vector<16x128xf32>, vector<256x128xf32>, vector<16x256xf32> -> vector<16x256xf32>
    %c0_3 = arith.constant 0 : index
    %c0_4 = arith.constant 0 : index
    %3 = vector.load %arg3[%c0_3, %c0_4] : memref<256x128xf32, #tpu.memory_space<vmem>>, vector<256x128xf32>
    %cst_5 = arith.constant dense<0.000000e+00> : vector<16x256xf32>
    %4 = tpu.matmul %0, %3, %cst_5 {dimension_numbers = #tpu.dot_dimension_numbers<[1], [1], [0], [0], [0, 0, 1, 0], [], []>} : vector<16x128xf32>, vector<256x128xf32>, vector<16x256xf32> -> vector<16x256xf32>
    %5 = arith.negf %2 : vector<16x256xf32>
    %6 = math.exp %5 : vector<16x256xf32>
    %cst_6 = arith.constant 1.000000e+00 : f32
    %7 = vector.broadcast %cst_6 : f32 to vector<16x256xf32>
    %8 = arith.addf %7, %6 : vector<16x256xf32>
    %9 = arith.divf %7, %8 : vector<16x256xf32>
    %10 = arith.mulf %2, %9 : vector<16x256xf32>
    %11 = arith.mulf %10, %4 : vector<16x256xf32>
    %c0_7 = arith.constant 0 : index
    %c0_8 = arith.constant 0 : index
    %12 = vector.load %arg4[%c0_7, %c0_8] : memref<128x256xf32, #tpu.memory_space<vmem>>, vector<128x256xf32>
    %cst_9 = arith.constant dense<0.000000e+00> : vector<16x128xf32>
    %13 = tpu.matmul %11, %12, %cst_9 {dimension_numbers = #tpu.dot_dimension_numbers<[1], [1], [0], [0], [0, 0, 1, 0], [], []>} : vector<16x256xf32>, vector<128x256xf32>, vector<16x128xf32> -> vector<16x128xf32>
    %c0_10 = arith.constant 0 : index
    %c0_11 = arith.constant 0 : index
    %14 = vector.load %arg5[%c0_10, %c0_11] : memref<16x128xf32, #tpu.memory_space<vmem>>, vector<16x128xf32>
    tpu.vector_store %arg5[%c0_10, %c0_11], %13 {strides = array<i32>} : memref<16x128xf32, #tpu.memory_space<vmem>>, vector<16x128xf32>,
    return
  }
  func.func @transform_0(%arg0: i32) -> (i32, i32) {
    %c0_i32 = arith.constant 0 : i32
    %c0_i32_0 = arith.constant 0 : i32
    return %arg0, %c0_i32 : i32, i32
  }
  func.func @transform_1(%arg0: i32) -> (i32, i32) {
    %c0_i32 = arith.constant 0 : i32
    %c0_i32_0 = arith.constant 0 : i32
    %c0_i32_1 = arith.constant 0 : i32
    return %c0_i32, %c0_i32_0 : i32, i32
  }
  func.func @transform_2(%arg0: i32) -> (i32, i32) {
    %c0_i32 = arith.constant 0 : i32
    %c0_i32_0 = arith.constant 0 : i32
    %c0_i32_1 = arith.constant 0 : i32
    return %c0_i32, %c0_i32_0 : i32, i32
  }
  func.func @transform_3(%arg0: i32) -> (i32, i32) {
    %c0_i32 = arith.constant 0 : i32
    %c0_i32_0 = arith.constant 0 : i32
    %c0_i32_1 = arith.constant 0 : i32
    return %c0_i32, %c0_i32_0 : i32, i32
  }
  func.func @transform_4(%arg0: i32) -> (i32, i32) {
    %c0_i32 = arith.constant 0 : i32
    %c0_i32_0 = arith.constant 0 : i32
    return %arg0, %c0_i32 : i32, i32
  }
}

</mosaic_0001>

<llo_original>
// kernel: feed_forward.1
$region0: #{feed_forward.1}
  #allocation0 [shape = 'u32[]', space=smem, size = 0x4, offset = 0x4, fixed_abs, tag = 'smem constant byte address 0x4 - core index']
  #allocation1 [shape = 'u32[144,128]{1,0:T(1,128)}', space=vmem, size = 0x12000, scoped, tag = 'internal scratch']
  %s0 = inlined_call_operand.hbm [shape: f32[16,128], index: 0, kind: input, shape index: {}]
  %s1 = inlined_call_operand.hbm [shape: f32[256,128], index: 1, kind: input, shape index: {}]
  %s2 = inlined_call_operand.hbm [shape: f32[256,128], index: 2, kind: input, shape index: {}]
  %s3 = inlined_call_operand.hbm [shape: f32[128,256], index: 3, kind: input, shape index: {}]
  %s4 = inlined_call_operand.hbm [shape: f32[16,128], index: 4, kind: output, shape index: {}]
  %s5 = sld [smem:[#allocation0]]
  $region42: #{feed_forward.1} parent=0
    _
  %s7 = ssub.s32 1, %s5
  %s8 = scalar_select 0, %s7, %s5
  $region1: #{feed_forward.1} parent=0
    #allocation2 [shape = 'u8[8192]{0}', space=vmem, size = 0x2000, scoped, tag = 'input window, operand 0, single buffered']
    #allocation3 [shape = 's32[1]{0}', space=sflag, size = 0x4, scoped, tag = 'scoped memory for feed_forward.1']
    #allocation4 [shape = 's32[1]{0}', space=sflag, size = 0x4, scoped, tag = 'scoped memory for feed_forward.1']
    #allocation5 [shape = 'u8[131072]{0}', space=vmem, size = 0x20000, scoped, tag = 'input window, operand 1, single buffered']
    #allocation6 [shape = 's32[1]{0}', space=sflag, size = 0x4, scoped, tag = 'scoped memory for feed_forward.1']
    #allocation7 [shape = 'u8[131072]{0}', space=vmem, size = 0x20000, scoped, tag = 'input window, operand 2, single buffered']
    #allocation8 [shape = 'u8[131072]{0}', space=vmem, size = 0x20000, scoped, tag = 'input window, operand 3, single buffered']
    #allocation9 [shape = 's32[1]{0}', space=sflag, size = 0x4, scoped, tag = 'scoped memory for feed_forward.1']
    #allocation10 [shape = 'u8[8192]{0}', space=vmem, size = 0x2000, scoped, tag = 'output window, operand 0, single buffered']
    %9 = vsyncpa [#allocation3], 0
    %10 = vsyncpa [#allocation6], 0
    %11 = vsyncpa [#allocation9], 0
    %12 = vsyncpa [#allocation4], 0
    // Predicated region
    $region2: #{feed_forward.1} parent=1 // pred_check
      _
    $region3: #{feed_forward.1} parent=1 // pred_check_branch
      %14 = sbr.rel (0) target = $region5
    $region4: #{feed_forward.1} parent=1 // pred_region
      %s16 = ssub.s32 256, 256
      %17 = vsyncadd [#allocation3], %s16
      %s18 = sshll.u32 [#allocation2], 4
      %s19 = int_to_ptr.vmem [resolvable:$true] %s18
      %24 = dma.hbm_to_vmem [thread:$0]  %s0, 256, %s19, [#allocation3], 128, 128, 8
    $region5: #{feed_forward.1} parent=1 // pred_fallthru
      _
    // Predicated region
    $region6: #{feed_forward.1} parent=1 // pred_check
      _
    $region7: #{feed_forward.1} parent=1 // pred_check_branch
      %26 = sbr.rel (0) target = $region9
    $region8: #{feed_forward.1} parent=1 // pred_region
      %s28 = ssub.s32 4096, 4096
      %29 = vsyncadd [#allocation6], %s28
      %s30 = sshll.u32 [#allocation5], 4
      %s31 = int_to_ptr.vmem [resolvable:$true] %s30
      %36 = dma.hbm_to_vmem [thread:$0]  %s1, 4096, %s31, [#allocation6], 128, 128, 8
    $region9: #{feed_forward.1} parent=1 // pred_fallthru
      _
    // Predicated region
    $region10: #{feed_forward.1} parent=1 // pred_check
      _
    $region11: #{feed_forward.1} parent=1 // pred_check_branch
      %38 = sbr.rel (0) target = $region13
    $region12: #{feed_forward.1} parent=1 // pred_region
      %s40 = ssub.s32 4096, 4096
      %41 = vsyncadd [#allocation6], %s40
      %s42 = sshll.u32 [#allocation7], 4
      %s43 = int_to_ptr.vmem [resolvable:$true] %s42
      %48 = dma.hbm_to_vmem [thread:$0]  %s2, 4096, %s43, [#allocation6], 128, 128, 8
    $region13: #{feed_forward.1} parent=1 // pred_fallthru
      _
    // Predicated region
    $region14: #{feed_forward.1} parent=1 // pred_check
      _
    $region15: #{feed_forward.1} parent=1 // pred_check_branch
      %50 = sbr.rel (0) target = $region17
    $region16: #{feed_forward.1} parent=1 // pred_region
      %s52 = ssub.s32 4096, 4096
      %53 = vsyncadd [#allocation9], %s52
      %s54 = sshll.u32 [#allocation8], 4
      %s55 = int_to_ptr.vmem [resolvable:$true] %s54
      %60 = dma.hbm_to_vmem [thread:$0]  %s3, 4096, %s55, [#allocation9], 256, 256, 16
    $region17: #{feed_forward.1} parent=1 // pred_fallthru
      _
    // Predicated region
    $region18: #{feed_forward.1} parent=1 // pred_check
      _
    $region19: #{feed_forward.1} parent=1 // pred_check_branch
      %62 = sbr.rel (0) target = $region21
    $region20: #{feed_forward.1} parent=1 // pred_region
      %63 = dma.done [#allocation3], 256
    $region21: #{feed_forward.1} parent=1 // pred_fallthru
      _
    // Predicated region
    $region22: #{feed_forward.1} parent=1 // pred_check
      _
    $region23: #{feed_forward.1} parent=1 // pred_check_branch
      %65 = sbr.rel (0) target = $region25
    $region24: #{feed_forward.1} parent=1 // pred_region
      %66 = dma.done [#allocation6], 4096
    $region25: #{feed_forward.1} parent=1 // pred_fallthru
      _
    // Predicated region
    $region26: #{feed_forward.1} parent=1 // pred_check
      _
    $region27: #{feed_forward.1} parent=1 // pred_check_branch
      %68 = sbr.rel (0) target = $region29
    $region28: #{feed_forward.1} parent=1 // pred_region
      %69 = dma.done [#allocation6], 4096
    $region29: #{feed_forward.1} parent=1 // pred_fallthru
      _
    // Predicated region
    $region30: #{feed_forward.1} parent=1 // pred_check
      _
    $region31: #{feed_forward.1} parent=1 // pred_check_branch
      %71 = sbr.rel (0) target = $region33
    $region32: #{feed_forward.1} parent=1 // pred_region
      %72 = dma.done [#allocation9], 4096
    $region33: #{feed_forward.1} parent=1 // pred_fallthru
      _
    %v73 = vld [vmem:[#allocation2] sm:$0xff]
    %v74 = vld [vmem:[#allocation2 + $0x8] sm:$0xff]
    %v75 = vld [vmem:[#allocation5] sm:$0xff]
    %v76 = vld [vmem:[#allocation5 + $0x8] sm:$0xff]
    %v77 = vld [vmem:[#allocation5 + $0x10] sm:$0xff]
    %v78 = vld [vmem:[#allocation5 + $0x18] sm:$0xff]
    %v79 = vld [vmem:[#allocation5 + $0x20] sm:$0xff]
    %v80 = vld [vmem:[#allocation5 + $0x28] sm:$0xff]
    %v81 = vld [vmem:[#allocation5 + $0x30] sm:$0xff]
    %v82 = vld [vmem:[#allocation5 + $0x38] sm:$0xff]
    %v83 = vld [vmem:[#allocation5 + $0x40] sm:$0xff]
    %v84 = vld [vmem:[#allocation5 + $0x48] sm:$0xff]
    %v85 = vld [vmem:[#allocation5 + $0x50] sm:$0xff]
    %v86 = vld [vmem:[#allocation5 + $0x58] sm:$0xff]
    %v87 = vld [vmem:[#allocation5 + $0x60] sm:$0xff]
    %v88 = vld [vmem:[#allocation5 + $0x68] sm:$0xff]
    %v89 = vld [vmem:[#allocation5 + $0x70] sm:$0xff]
    %v90 = vld [vmem:[#allocation5 + $0x78] sm:$0xff]
    %v91 = vld [vmem:[#allocation5 + $0x80] sm:$0xff]
    %v92 = vld [vmem:[#allocation5 + $0x88] sm:$0xff]
    %v93 = vld [vmem:[#allocation5 + $0x90] sm:$0xff]
    %v94 = vld [vmem:[#allocation5 + $0x98] sm:$0xff]
    %v95 = vld [vmem:[#allocation5 + $0xa0] sm:$0xff]
    %v96 = vld [vmem:[#allocation5 + $0xa8] sm:$0xff]
    %v97 = vld [vmem:[#allocation5 + $0xb0] sm:$0xff]
    %v98 = vld [vmem:[#allocation5 + $0xb8] sm:$0xff]
    %v99 = vld [vmem:[#allocation5 + $0xc0] sm:$0xff]
    %v100 = vld [vmem:[#allocation5 + $0xc8] sm:$0xff]
    %v101 = vld [vmem:[#allocation5 + $0xd0] sm:$0xff]
    %v102 = vld [vmem:[#allocation5 + $0xd8] sm:$0xff]
    %v103 = vld [vmem:[#allocation5 + $0xe0] sm:$0xff]
    %v104 = vld [vmem:[#allocation5 + $0xe8] sm:$0xff]
    %v105 = vld [vmem:[#allocation5 + $0xf0] sm:$0xff]
    %v106 = vld [vmem:[#allocation5 + $0xf8] sm:$0xff]
    %107 = vmatprep.subr.mxu0 0.0
    %108 = vmatpush1.xpose.msra.mxu0 %v75
    %109 = vmatprep.subr.mxu0 0.0
    %110 = vmatpush1.xpose.msra.mxu0 %v76
    %111 = vmatprep.subr.mxu0 0.0
    %112 = vmatpush1.xpose.msra.mxu0 %v77
    %113 = vmatprep.subr.mxu0 0.0
    %114 = vmatpush1.xpose.msra.mxu0 %v78
    %115 = vmatprep.subr.mxu0 0.0
    %116 = vmatpush1.xpose.msra.mxu0 %v79
    %117 = vmatprep.subr.mxu0 0.0
    %118 = vmatpush1.xpose.msra.mxu0 %v80
    %119 = vmatprep.subr.mxu0 0.0
    %120 = vmatpush1.xpose.msra.mxu0 %v81
    %121 = vmatprep.subr.mxu0 0.0
    %122 = vmatpush1.xpose.msra.mxu0 %v82
    %123 = vmatprep.subr.mxu0 0.0
    %124 = vmatpush1.xpose.msra.mxu0 %v83
    %125 = vmatprep.subr.mxu0 0.0
    %126 = vmatpush1.xpose.msra.mxu0 %v84
    %127 = vmatprep.subr.mxu0 0.0
    %128 = vmatpush1.xpose.msra.mxu0 %v85
    %129 = vmatprep.subr.mxu0 0.0
    %130 = vmatpush1.xpose.msra.mxu0 %v86
    %131 = vmatprep.subr.mxu0 0.0
    %132 = vmatpush1.xpose.msra.mxu0 %v87
    %133 = vmatprep.subr.mxu0 0.0
    %134 = vmatpush1.xpose.msra.mxu0 %v88
    %135 = vmatprep.subr.mxu0 0.0
    %136 = vmatpush1.xpose.msra.mxu0 %v89
    %137 = vmatprep.subr.mxu0 0.0
    %138 = vmatpush1.xpose.msra.mxu0 %v90
    %139 = vmatprep.subr.mxu0 0.0
    %140 = vmatpush1.xpose.msra.mxu0 %v91
    %141 = vmatprep.subr.mxu0 0.0
    %142 = vmatpush1.xpose.msra.mxu0 %v92
    %143 = vmatprep.subr.mxu0 0.0
    %144 = vmatpush1.xpose.msra.mxu0 %v93
    %145 = vmatprep.subr.mxu0 0.0
    %146 = vmatpush1.xpose.msra.mxu0 %v94
    %147 = vmatprep.subr.mxu0 0.0
    %148 = vmatpush1.xpose.msra.mxu0 %v95
    %149 = vmatprep.subr.mxu0 0.0
    %150 = vmatpush1.xpose.msra.mxu0 %v96
    %151 = vmatprep.subr.mxu0 0.0
    %152 = vmatpush1.xpose.msra.mxu0 %v97
    %153 = vmatprep.subr.mxu0 0.0
    %154 = vmatpush1.xpose.msra.mxu0 %v98
    %155 = vmatprep.subr.mxu0 0.0
    %156 = vmatpush1.xpose.msra.mxu0 %v99
    %157 = vmatprep.subr.mxu0 0.0
    %158 = vmatpush1.xpose.msra.mxu0 %v100
    %159 = vmatprep.subr.mxu0 0.0
    %160 = vmatpush1.xpose.msra.mxu0 %v101
    %161 = vmatprep.subr.mxu0 0.0
    %162 = vmatpush1.xpose.msra.mxu0 %v102
    %163 = vmatprep.subr.mxu0 0.0
    %164 = vmatpush1.xpose.msra.mxu0 %v103
    %165 = vmatprep.subr.mxu0 0.0
    %166 = vmatpush1.xpose.msra.mxu0 %v104
    %167 = vmatprep.subr.mxu0 0.0
    %168 = vmatpush1.xpose.msra.mxu0 %v105
    %169 = vmatprep.subr.mxu0 0.0
    %170 = vmatpush1.xpose.msra.mxu0 %v106
    %171 = vmatprep.mubr.f32.mxu0 0.0
    %172 = vmatmul.mubr.f32.gmra.mrb[0].mxu0 %v73
    %v173 = vpop.f32.mrb[0].mxu0
    %v174 = vadd.f32 0.0, %v173
    %v175 = vpop.f32.mrb[0].mxu0
    %v176 = vadd.f32 0.0, %v175
    %177 = vmatprep.mubr.f32.mxu0 0.0
    %178 = vmatmul.mubr.f32.gmra.mrb[0].mxu0 %v74
    %v179 = vpop.f32.mrb[0].mxu0
    %v180 = vadd.f32 0.0, %v179
    %v181 = vpop.f32.mrb[0].mxu0
    %v182 = vadd.f32 0.0, %v181
    %183 = vdwg.mxu0
    %v184 = vld [vmem:[#allocation7] sm:$0xff]
    %v185 = vld [vmem:[#allocation7 + $0x8] sm:$0xff]
    %v186 = vld [vmem:[#allocation7 + $0x10] sm:$0xff]
    %v187 = vld [vmem:[#allocation7 + $0x18] sm:$0xff]
    %v188 = vld [vmem:[#allocation7 + $0x20] sm:$0xff]
    %v189 = vld [vmem:[#allocation7 + $0x28] sm:$0xff]
    %v190 = vld [vmem:[#allocation7 + $0x30] sm:$0xff]
    %v191 = vld [vmem:[#allocation7 + $0x38] sm:$0xff]
    %v192 = vld [vmem:[#allocation7 + $0x40] sm:$0xff]
    %v193 = vld [vmem:[#allocation7 + $0x48] sm:$0xff]
    %v194 = vld [vmem:[#allocation7 + $0x50] sm:$0xff]
    %v195 = vld [vmem:[#allocation7 + $0x58] sm:$0xff]
    %v196 = vld [vmem:[#allocation7 + $0x60] sm:$0xff]
    %v197 = vld [vmem:[#allocation7 + $0x68] sm:$0xff]
    %v198 = vld [vmem:[#allocation7 + $0x70] sm:$0xff]
    %v199 = vld [vmem:[#allocation7 + $0x78] sm:$0xff]
    %v200 = vld [vmem:[#allocation7 + $0x80] sm:$0xff]
    %v201 = vld [vmem:[#allocation7 + $0x88] sm:$0xff]
    %v202 = vld [vmem:[#allocation7 + $0x90] sm:$0xff]
    %v203 = vld [vmem:[#allocation7 + $0x98] sm:$0xff]
    %v204 = vld [vmem:[#allocation7 + $0xa0] sm:$0xff]
    %v205 = vld [vmem:[#allocation7 + $0xa8] sm:$0xff]
    %v206 = vld [vmem:[#allocation7 + $0xb0] sm:$0xff]
    %v207 = vld [vmem:[#allocation7 + $0xb8] sm:$0xff]
    %v208 = vld [vmem:[#allocation7 + $0xc0] sm:$0xff]
    %v209 = vld [vmem:[#allocation7 + $0xc8] sm:$0xff]
    %v210 = vld [vmem:[#allocation7 + $0xd0] sm:$0xff]
    %v211 = vld [vmem:[#allocation7 + $0xd8] sm:$0xff]
    %v212 = vld [vmem:[#allocation7 + $0xe0] sm:$0xff]
    %v213 = vld [vmem:[#allocation7 + $0xe8] sm:$0xff]
    %v214 = vld [vmem:[#allocation7 + $0xf0] sm:$0xff]
    %v215 = vld [vmem:[#allocation7 + $0xf8] sm:$0xff]
    %216 = vmatprep.subr.mxu0 0.0
    %217 = vmatpush1.xpose.msra.mxu0 %v184
    %218 = vmatprep.subr.mxu0 0.0
    %219 = vmatpush1.xpose.msra.mxu0 %v185
    %220 = vmatprep.subr.mxu0 0.0
    %221 = vmatpush1.xpose.msra.mxu0 %v186
    %222 = vmatprep.subr.mxu0 0.0
    %223 = vmatpush1.xpose.msra.mxu0 %v187
    %224 = vmatprep.subr.mxu0 0.0
    %225 = vmatpush1.xpose.msra.mxu0 %v188
    %226 = vmatprep.subr.mxu0 0.0
    %227 = vmatpush1.xpose.msra.mxu0 %v189
    %228 = vmatprep.subr.mxu0 0.0
    %229 = vmatpush1.xpose.msra.mxu0 %v190
    %230 = vmatprep.subr.mxu0 0.0
    %231 = vmatpush1.xpose.msra.mxu0 %v191
    %232 = vmatprep.subr.mxu0 0.0
    %233 = vmatpush1.xpose.msra.mxu0 %v192
    %234 = vmatprep.subr.mxu0 0.0
    %235 = vmatpush1.xpose.msra.mxu0 %v193
    %236 = vmatprep.subr.mxu0 0.0
    %237 = vmatpush1.xpose.msra.mxu0 %v194
    %238 = vmatprep.subr.mxu0 0.0
    %239 = vmatpush1.xpose.msra.mxu0 %v195
    %240 = vmatprep.subr.mxu0 0.0
    %241 = vmatpush1.xpose.msra.mxu0 %v196
    %242 = vmatprep.subr.mxu0 0.0
    %243 = vmatpush1.xpose.msra.mxu0 %v197
    %244 = vmatprep.subr.mxu0 0.0
    %245 = vmatpush1.xpose.msra.mxu0 %v198
    %246 = vmatprep.subr.mxu0 0.0
    %247 = vmatpush1.xpose.msra.mxu0 %v199
    %248 = vmatprep.subr.mxu0 0.0
    %249 = vmatpush1.xpose.msra.mxu0 %v200
    %250 = vmatprep.subr.mxu0 0.0
    %251 = vmatpush1.xpose.msra.mxu0 %v201
    %252 = vmatprep.subr.mxu0 0.0
    %253 = vmatpush1.xpose.msra.mxu0 %v202
    %254 = vmatprep.subr.mxu0 0.0
    %255 = vmatpush1.xpose.msra.mxu0 %v203
    %256 = vmatprep.subr.mxu0 0.0
    %257 = vmatpush1.xpose.msra.mxu0 %v204
    %258 = vmatprep.subr.mxu0 0.0
    %259 = vmatpush1.xpose.msra.mxu0 %v205
    %260 = vmatprep.subr.mxu0 0.0
    %261 = vmatpush1.xpose.msra.mxu0 %v206
    %262 = vmatprep.subr.mxu0 0.0
    %263 = vmatpush1.xpose.msra.mxu0 %v207
    %264 = vmatprep.subr.mxu0 0.0
    %265 = vmatpush1.xpose.msra.mxu0 %v208
    %266 = vmatprep.subr.mxu0 0.0
    %267 = vmatpush1.xpose.msra.mxu0 %v209
    %268 = vmatprep.subr.mxu0 0.0
    %269 = vmatpush1.xpose.msra.mxu0 %v210
    %270 = vmatprep.subr.mxu0 0.0
    %271 = vmatpush1.xpose.msra.mxu0 %v211
    %272 = vmatprep.subr.mxu0 0.0
    %273 = vmatpush1.xpose.msra.mxu0 %v212
    %274 = vmatprep.subr.mxu0 0.0
    %275 = vmatpush1.xpose.msra.mxu0 %v213
    %276 = vmatprep.subr.mxu0 0.0
    %277 = vmatpush1.xpose.msra.mxu0 %v214
    %278 = vmatprep.subr.mxu0 0.0
    %279 = vmatpush1.xpose.msra.mxu0 %v215
    %280 = vmatprep.mubr.f32.mxu0 0.0
    %281 = vmatmul.mubr.f32.gmra.mrb[0].mxu0 %v73
    %v282 = vpop.f32.mrb[0].mxu0
    %v283 = vadd.f32 0.0, %v282
    %v284 = vpop.f32.mrb[0].mxu0
    %v285 = vadd.f32 0.0, %v284
    %286 = vmatprep.mubr.f32.mxu0 0.0
    %287 = vmatmul.mubr.f32.gmra.mrb[0].mxu0 %v74
    %v288 = vpop.f32.mrb[0].mxu0
    %v289 = vadd.f32 0.0, %v288
    %v290 = vpop.f32.mrb[0].mxu0
    %v291 = vadd.f32 0.0, %v290
    %292 = vdwg.mxu0
    %v293 = vxor.u32 %v174, 2147483648
    %v294 = vxor.u32 %v176, 2147483648
    %v295 = vxor.u32 %v180, 2147483648
    %v296 = vxor.u32 %v182, 2147483648
    %v297 = vmul.f32 %v293, 1.442695
    %v298 = vpow.pop %v297
    %v299 = vmul.f32 %v294, 1.442695
    %v300 = vpow.pop %v299
    %v301 = vmul.f32 %v295, 1.442695
    %v302 = vpow.pop %v301
    %v303 = vmul.f32 %v296, 1.442695
    %v304 = vpow.pop %v303
    %v305 = vadd.f32 %v298, 1.0
    %v306 = vadd.f32 %v300, 1.0
    %v307 = vadd.f32 %v302, 1.0
    %v308 = vadd.f32 %v304, 1.0
    %v309 = vrcp.pop %v305
    %v310 = vmul.f32 1.0, %v309
    %v311 = vrcp.pop %v306
    %v312 = vmul.f32 1.0, %v311
    %v313 = vrcp.pop %v307
    %v314 = vmul.f32 1.0, %v313
    %v315 = vrcp.pop %v308
    %v316 = vmul.f32 1.0, %v315
    %v317 = vmul.f32 %v174, %v310
    %v318 = vmul.f32 %v176, %v312
    %v319 = vmul.f32 %v180, %v314
    %v320 = vmul.f32 %v182, %v316
    %v321 = vmul.f32 %v317, %v283
    %v322 = vmul.f32 %v318, %v285
    %v323 = vmul.f32 %v319, %v289
    %v324 = vmul.f32 %v320, %v291
    %v325 = vld [vmem:[#allocation8] sm:$0xff]
    %v326 = vld [vmem:[#allocation8 + $0x8] sm:$0xff]
    %v327 = vld [vmem:[#allocation8 + $0x10] sm:$0xff]
    %v328 = vld [vmem:[#allocation8 + $0x18] sm:$0xff]
    %v329 = vld [vmem:[#allocation8 + $0x20] sm:$0xff]
    %v330 = vld [vmem:[#allocation8 + $0x28] sm:$0xff]
    %v331 = vld [vmem:[#allocation8 + $0x30] sm:$0xff]
    %v332 = vld [vmem:[#allocation8 + $0x38] sm:$0xff]
    %v333 = vld [vmem:[#allocation8 + $0x40] sm:$0xff]
    %v334 = vld [vmem:[#allocation8 + $0x48] sm:$0xff]
    %v335 = vld [vmem:[#allocation8 + $0x50] sm:$0xff]
    %v336 = vld [vmem:[#allocation8 + $0x58] sm:$0xff]
    %v337 = vld [vmem:[#allocation8 + $0x60] sm:$0xff]
    %v338 = vld [vmem:[#allocation8 + $0x68] sm:$0xff]
    %v339 = vld [vmem:[#allocation8 + $0x70] sm:$0xff]
    %v340 = vld [vmem:[#allocation8 + $0x78] sm:$0xff]
    %v341 = vld [vmem:[#allocation8 + $0x80] sm:$0xff]
    %v342 = vld [vmem:[#allocation8 + $0x88] sm:$0xff]
    %v343 = vld [vmem:[#allocation8 + $0x90] sm:$0xff]
    %v344 = vld [vmem:[#allocation8 + $0x98] sm:$0xff]
    %v345 = vld [vmem:[#allocation8 + $0xa0] sm:$0xff]
    %v346 = vld [vmem:[#allocation8 + $0xa8] sm:$0xff]
    %v347 = vld [vmem:[#allocation8 + $0xb0] sm:$0xff]
    %v348 = vld [vmem:[#allocation8 + $0xb8] sm:$0xff]
    %v349 = vld [vmem:[#allocation8 + $0xc0] sm:$0xff]
    %v350 = vld [vmem:[#allocation8 + $0xc8] sm:$0xff]
    %v351 = vld [vmem:[#allocation8 + $0xd0] sm:$0xff]
    %v352 = vld [vmem:[#allocation8 + $0xd8] sm:$0xff]
    %v353 = vld [vmem:[#allocation8 + $0xe0] sm:$0xff]
    %v354 = vld [vmem:[#allocation8 + $0xe8] sm:$0xff]
    %v355 = vld [vmem:[#allocation8 + $0xf0] sm:$0xff]
    %v356 = vld [vmem:[#allocation8 + $0xf8] sm:$0xff]
    %357 = vmatprep.subr.mxu0 %v326
    %358 = vmatpush1.xpose.msra.mxu0 %v325
    %359 = vmatprep.subr.mxu0 %v328
    %360 = vmatpush1.xpose.msra.mxu0 %v327
    %361 = vmatprep.subr.mxu0 %v330
    %362 = vmatpush1.xpose.msra.mxu0 %v329
    %363 = vmatprep.subr.mxu0 %v332
    %364 = vmatpush1.xpose.msra.mxu0 %v331
    %365 = vmatprep.subr.mxu0 %v334
    %366 = vmatpush1.xpose.msra.mxu0 %v333
    %367 = vmatprep.subr.mxu0 %v336
    %368 = vmatpush1.xpose.msra.mxu0 %v335
    %369 = vmatprep.subr.mxu0 %v338
    %370 = vmatpush1.xpose.msra.mxu0 %v337
    %371 = vmatprep.subr.mxu0 %v340
    %372 = vmatpush1.xpose.msra.mxu0 %v339
    %373 = vmatprep.subr.mxu0 %v342
    %374 = vmatpush1.xpose.msra.mxu0 %v341
    %375 = vmatprep.subr.mxu0 %v344
    %376 = vmatpush1.xpose.msra.mxu0 %v343
    %377 = vmatprep.subr.mxu0 %v346
    %378 = vmatpush1.xpose.msra.mxu0 %v345
    %379 = vmatprep.subr.mxu0 %v348
    %380 = vmatpush1.xpose.msra.mxu0 %v347
    %381 = vmatprep.subr.mxu0 %v350
    %382 = vmatpush1.xpose.msra.mxu0 %v349
    %383 = vmatprep.subr.mxu0 %v352
    %384 = vmatpush1.xpose.msra.mxu0 %v351
    %385 = vmatprep.subr.mxu0 %v354
    %386 = vmatpush1.xpose.msra.mxu0 %v353
    %387 = vmatprep.subr.mxu0 %v356
    %388 = vmatpush1.xpose.msra.mxu0 %v355
    %389 = vmatprep.subr.mxu0 0.0
    %390 = vmatpush1.xpose.msra.mxu0 0.0
    %391 = vmatprep.subr.mxu0 0.0
    %392 = vmatpush1.xpose.msra.mxu0 0.0
    %393 = vmatprep.subr.mxu0 0.0
    %394 = vmatpush1.xpose.msra.mxu0 0.0
    %395 = vmatprep.subr.mxu0 0.0
    %396 = vmatpush1.xpose.msra.mxu0 0.0
    %397 = vmatprep.subr.mxu0 0.0
    %398 = vmatpush1.xpose.msra.mxu0 0.0
    %399 = vmatprep.subr.mxu0 0.0
    %400 = vmatpush1.xpose.msra.mxu0 0.0
    %401 = vmatprep.subr.mxu0 0.0
    %402 = vmatpush1.xpose.msra.mxu0 0.0
    %403 = vmatprep.subr.mxu0 0.0
    %404 = vmatpush1.xpose.msra.mxu0 0.0
    %405 = vmatprep.subr.mxu0 0.0
    %406 = vmatpush1.xpose.msra.mxu0 0.0
    %407 = vmatprep.subr.mxu0 0.0
    %408 = vmatpush1.xpose.msra.mxu0 0.0
    %409 = vmatprep.subr.mxu0 0.0
    %410 = vmatpush1.xpose.msra.mxu0 0.0
    %411 = vmatprep.subr.mxu0 0.0
    %412 = vmatpush1.xpose.msra.mxu0 0.0
    %413 = vmatprep.subr.mxu0 0.0
    %414 = vmatpush1.xpose.msra.mxu0 0.0
    %415 = vmatprep.subr.mxu0 0.0
    %416 = vmatpush1.xpose.msra.mxu0 0.0
    %417 = vmatprep.subr.mxu0 0.0
    %418 = vmatpush1.xpose.msra.mxu0 0.0
    %419 = vmatprep.subr.mxu0 0.0
    %420 = vmatpush1.xpose.msra.mxu0 0.0
    %421 = vmatprep.mubr.f32.mxu0 %v322
    %422 = vmatmul.mubr.f32.gmra.mrb[0].mxu0 %v321
    %v423 = vpop.f32.mrb[0].mxu0
    %v424 = vadd.f32 0.0, %v423
    %v425 = vpop.f32.mrb[0].mxu0
    %426 = vmatprep.mubr.f32.mxu0 %v324
    %427 = vmatmul.mubr.f32.gmra.mrb[0].mxu0 %v323
    %v428 = vpop.f32.mrb[0].mxu0
    %v429 = vadd.f32 0.0, %v428
    %v430 = vpop.f32.mrb[0].mxu0
    %431 = vdwg.mxu0
    %432 = vst [vmem:[#allocation10] sm:$0xff] %v424
    %433 = vst [vmem:[#allocation10 + $0x8] sm:$0xff] %v429
    // Predicated region
    $region34: #{feed_forward.1} parent=1 // pred_check
      _
    $region35: #{feed_forward.1} parent=1 // pred_check_branch
      %435 = sbr.rel (0) target = $region37
    $region36: #{feed_forward.1} parent=1 // pred_region
      %s437 = ssub.s32 256, 256
      %438 = vsyncadd [#allocation4], %s437
      %s439 = sshll.u32 [#allocation10], 4
      %s440 = int_to_ptr.vmem [resolvable:$true] %s439
      %445 = dma.vmem_to_hbm [thread:$0]  %s440, 256, %s4, [#allocation4], 128, 128, 8
    $region37: #{feed_forward.1} parent=1 // pred_fallthru
      _
    // Predicated region
    $region38: #{feed_forward.1} parent=1 // pred_check
      _
    $region39: #{feed_forward.1} parent=1 // pred_check_branch
      %447 = sbr.rel (0) target = $region41
    $region40: #{feed_forward.1} parent=1 // pred_region
      %448 = dma.done [#allocation4], 256
    $region41: #{feed_forward.1} parent=1 // pred_fallthru
      _
    %449 = vsyncpa [#allocation3], 1
    %450 = vsyncpa [#allocation6], 1
    %451 = vsyncpa [#allocation9], 1
    %452 = vsyncpa [#allocation4], 1

</llo_original>
